<compile_context>
chip_gen: v7x
topology: tpu7x:2x2x1
jax: 0.10.0
libtpu: 0.0.40
codegen_flags: <defaults>
</compile_context>

<pallas_src>
import math
from functools import partial

import jax
import jax.numpy as jnp
from jax.experimental import pallas as pl
from jax.experimental.pallas import tpu as pltpu


def _round_up(n, m):
    return ((n + m - 1) // m) * m


def _arcface_kernel(x_ref, wt_ref, inw_ref, y_ref, out_ref,
                    nx_sc, m_sc, l_sc, t_sc, *,
                    s, cos_m, sin_m, thresh, cos_hi, eps, c_actual, block_c):
    j = pl.program_id(1)                      # class-tile index (reduction axis)
    last_j = pl.num_programs(1) - 1

    # ---- per-batch-tile init (first class tile of this row block) ----------
    @pl.when(j == 0)
    def _():
        x = x_ref[...]
        ssq = jnp.sum(x * x, axis=-1, keepdims=True)
        # F.normalize semantics: x / max(||x||, 1e-12); keeps padded all-zero
        # rows finite as well.
        nx_sc[...] = 1.0 / jnp.maximum(jnp.sqrt(ssq), 1e-12)
        m_sc[...] = jnp.full_like(m_sc, -1e30)   # running max
        l_sc[...] = jnp.zeros_like(l_sc)         # running sum of exp
        t_sc[...] = jnp.zeros_like(t_sc)         # target logit

    # ---- raw scores on the MXU: bf16 operands, f32 accumulation -------------
    raw = jnp.dot(x_ref[...].astype(jnp.bfloat16), wt_ref[...],
                  preferred_element_type=jnp.float32)
    # rank-1 post-scale instead of normalizing the x / w tiles in VMEM.
    cos_theta = raw * nx_sc[...] * inw_ref[...]
    cc = jnp.clip(cos_theta, -1.0 + eps, 1.0 - eps)

    bt, ct = cc.shape
    col = j * block_c + jax.lax.broadcasted_iota(jnp.int32, (bt, ct), 1)
    onehot = col == y_ref[...]                 # (bt, ct) target-column mask
    valid = col < c_actual                     # mask padded class columns

    # ---- additive angular margin, only on the gathered target cosine -------
    tgt_cc = jnp.sum(jnp.where(onehot, cc, 0.0), axis=-1, keepdims=True)
    sin_t = jnp.sqrt(jnp.maximum(1.0 - tgt_cc * tgt_cc, 0.0))
    ctm = tgt_cc * cos_m - sin_t * sin_m       # cos(acos(cc) + m)
    ctm = jnp.where(tgt_cc < thresh, cos_hi, ctm)   # theta_m <= 3.14159 clamp
    # TODO(synk): the theta_m >= 1e-5 lower clamp can never fire for m >= 1e-5
    # (default m = 0.5), so it is omitted.

    # logits = s * cos(theta_m); for non-target columns cos(acos(cc)) == cc.
    logits = jnp.where(onehot, s * ctm, s * cc)
    logits = jnp.where(valid, logits, -1e30)

    # ---- online softmax / cross-entropy update across class tiles ----------
    m_new = jnp.maximum(m_sc[...], jnp.max(logits, axis=-1, keepdims=True))
    alpha = jnp.exp(m_sc[...] - m_new)
    l_sc[...] = alpha * l_sc[...] + jnp.sum(jnp.exp(logits - m_new),
                                            axis=-1, keepdims=True)
    m_sc[...] = m_new
    t_sc[...] = t_sc[...] + jnp.sum(jnp.where(onehot, logits, 0.0),
                                    axis=-1, keepdims=True)

    # ---- finalize: per-row cross-entropy, written once per batch tile ------
    @pl.when(j == last_j)
    def _():
        out_ref[...] = m_sc[...] + jnp.log(l_sc[...]) - t_sc[...]


def arcface_loss(x, w, y, s=64.0, m=0.5, *, block_b=128, block_c=512):
    """Mean ArcFace cross-entropy.  x: (B, D) f32, w: (C, D) f32, y: (B,) int."""
    b, d = x.shape
    c, d2 = w.shape
    assert d == d2, "feat_dim mismatch between x and w"

    # The module renormalizes w rows every forward; fold that into an f32
    # inverse-norm rank-1 scale computed once per call, and stream w to the
    # MXU transposed + bf16 (halves HBM traffic for the dominant byte stream).
    w32 = w.astype(jnp.float32)
    inv_nw = 1.0 / jnp.maximum(jnp.sqrt(jnp.sum(w32 * w32, axis=-1)), 1e-12)
    wt = jnp.transpose(w32).astype(jnp.bfloat16)          # (D, C)

    # Tile sizes: multiples of (8, 128); class tile defaults to 512 (multiple
    # of 256 for v6e/v7x MXU, of 128 for v5e) which keeps the double-buffered
    # working set a few MiB — well under v7x's 64 MiB VMEM, so the default
    # scoped VMEM limit suffices (raise block_c / vmem_limit_bytes for huge D).
    bt = min(block_b, _round_up(b, 8))
    ct = min(block_c, _round_up(c, 128))
    bp = _round_up(b, bt)
    cp = _round_up(c, ct)
    dp = _round_up(d, 128)

    xp = jnp.pad(x.astype(jnp.float32), ((0, bp - b), (0, dp - d)))
    yp = jnp.pad(y.astype(jnp.int32), (0, bp - b)).reshape(bp, 1)
    wtp = jnp.pad(wt, ((0, dp - d), (0, cp - c)))
    inwp = jnp.pad(inv_nw, (0, cp - c)).reshape(1, cp)

    clamp_hi = 3.14159
    kernel = partial(
        _arcface_kernel,
        s=float(s),
        cos_m=math.cos(m),
        sin_m=math.sin(m),
        thresh=math.cos(clamp_hi - m),
        cos_hi=math.cos(clamp_hi),
        eps=1e-5,
        c_actual=c,
        block_c=ct,
    )

    per_row = pl.pallas_call(
        kernel,
        out_shape=jax.ShapeDtypeStruct((bp, 1), jnp.float32),
        grid_spec=pltpu.PrefetchScalarGridSpec(
            num_scalar_prefetch=0,
            grid=(bp // bt, cp // ct),
            in_specs=[
                pl.BlockSpec((bt, dp), lambda i, j: (i, 0)),   # x rows
                pl.BlockSpec((dp, ct), lambda i, j: (0, j)),   # w^T class tile
                pl.BlockSpec((1, ct), lambda i, j: (0, j)),    # 1/||w_c||
                pl.BlockSpec((bt, 1), lambda i, j: (i, 0)),    # labels
            ],
            out_specs=pl.BlockSpec((bt, 1), lambda i, j: (i, 0)),
            scratch_shapes=[
                pltpu.VMEM((bt, 1), jnp.float32),  # 1/||x_r||
                pltpu.VMEM((bt, 1), jnp.float32),  # running max
                pltpu.VMEM((bt, 1), jnp.float32),  # running sum of exp
                pltpu.VMEM((bt, 1), jnp.float32),  # target logit
            ],
        ),
        compiler_params=pltpu.CompilerParams(
            dimension_semantics=("parallel", "arbitrary")),
    )(xp, wtp, inwp, yp)

    return jnp.sum(per_row[:b, 0]) / b


def _arcface_loss_ref(x, w, y, s=64.0, m=0.5):
    """Pure-JAX f32 reference mirroring the PyTorch module."""
    xn = x / jnp.maximum(jnp.linalg.norm(x, axis=-1, keepdims=True), 1e-12)
    wn = w / jnp.maximum(jnp.linalg.norm(w, axis=-1, keepdims=True), 1e-12)
    cos_theta = xn @ wn.T
    theta_m = jnp.arccos(jnp.clip(cos_theta, -1 + 1e-5, 1 - 1e-5))
    onehot = jax.nn.one_hot(y, w.shape[0], dtype=cos_theta.dtype)
    theta_m = jnp.clip(theta_m + m * onehot, 1e-5, 3.14159)
    logits = s * jnp.cos(theta_m)            # == s * (cos_theta + d_theta)
    lse = jax.scipy.special.logsumexp(logits, axis=-1)
    tgt = jnp.take_along_axis(logits, y[:, None], axis=-1)[:, 0]
    return jnp.mean(lse - tgt)


if __name__ == "__main__":
    key = jax.random.PRNGKey(0)
    kx, kw, ky = jax.random.split(key, 3)

    # 640 classes -> two 512-wide class tiles (second partially padded),
    # exercising the online-softmax reduction and the class-padding mask.
    B, FEAT_DIM, SUBJ_NUM = 8, 128, 640

    x = jax.random.normal(kx, (B, FEAT_DIM), dtype=jnp.float32)
    # nn.init.xavier_normal_ for a (subj_num, feat_dim) parameter.
    std = math.sqrt(2.0 / (SUBJ_NUM + FEAT_DIM))
    w = std * jax.random.normal(kw, (SUBJ_NUM, FEAT_DIM), dtype=jnp.float32)
    y = jax.random.randint(ky, (B,), 0, SUBJ_NUM, dtype=jnp.int32)

    loss = jax.jit(arcface_loss)(x, w, y)
    jax.block_until_ready(loss)

    ref = _arcface_loss_ref(x, w, y)
    # bf16 MXU operands (f32 accumulation) -> generous tolerance.
    assert bool(jnp.isfinite(loss)), "non-finite loss"
    assert abs(float(loss) - float(ref)) <= max(0.05 * abs(float(ref)), 2.0), (
        float(loss), float(ref))
    print("KERNEL_OK")
</pallas_src>

<mosaic_0001>
module attributes {stable_mosaic.version = 11 : i64} {
  func.func @_arcface_kernel(%arg0: i32, %arg1: i32, %arg2: memref<8x128xf32, #tpu.memory_space<vmem>>, %arg3: memref<128x512xbf16, #tpu.memory_space<vmem>>, %arg4: memref<1x512xf32, #tpu.memory_space<vmem>>, %arg5: memref<8x1xi32, #tpu.memory_space<vmem>>, %arg6: memref<8x1xf32, #tpu.memory_space<vmem>>, %arg7: memref<8x1xf32, #tpu.memory_space<vmem>>, %arg8: memref<8x1xf32, #tpu.memory_space<vmem>>, %arg9: memref<8x1xf32, #tpu.memory_space<vmem>>, %arg10: memref<8x1xf32, #tpu.memory_space<vmem>>) attributes {dimension_semantics = [#tpu.dimension_semantics<parallel>, #tpu.dimension_semantics<arbitrary>], iteration_bounds = array<i64: 1, 2>, scalar_prefetch = 0 : i64, scratch_operands = 4 : i64, tpu.core_type = #tpu.core_type<tc>, window_params = [{transform_indices = @transform_0, window_bounds = array<i64: 8, 128>}, {transform_indices = @transform_1, window_bounds = array<i64: 128, 512>}, {transform_indices = @transform_2, window_bounds = array<i64: 1, 512>}, {transform_indices = @transform_3, window_bounds = array<i64: 8, 1>}, {transform_indices = @transform_4, window_bounds = array<i64: 8, 1>}]} {
    %c0_i32 = arith.constant 0 : i32
    %0 = arith.cmpi eq, %arg1, %c0_i32 : i32
    %1 = arith.extui %0 : i1 to i32
    %c0_i32_0 = arith.constant 0 : i32
    %2 = arith.cmpi ne, %1, %c0_i32_0 : i32
    scf.if %2 {
      %c0_42 = arith.constant 0 : index
      %c0_43 = arith.constant 0 : index
      %81 = vector.load %arg2[%c0_42, %c0_43] : memref<8x128xf32, #tpu.memory_space<vmem>>, vector<8x128xf32>
      %82 = arith.mulf %81, %81 : vector<8x128xf32>
      %cst_44 = arith.constant dense<0.000000e+00> : vector<8xf32>
      %83 = vector.multi_reduction <add>, %82, %cst_44 [1] : vector<8x128xf32> to vector<8xf32>
      %84 = vector.shape_cast %83 : vector<8xf32> to vector<8x1xf32>
      %85 = math.sqrt %84 : vector<8x1xf32>
      %cst_45 = arith.constant 9.99999996E-13 : f32
      %86 = vector.broadcast %cst_45 : f32 to vector<8x1xf32>
      %87 = arith.maximumf %85, %86 : vector<8x1xf32>
      %cst_46 = arith.constant 1.000000e+00 : f32
      %88 = vector.broadcast %cst_46 : f32 to vector<8x1xf32>
      %89 = arith.divf %88, %87 : vector<8x1xf32>
      %c0_47 = arith.constant 0 : index
      %c0_48 = arith.constant 0 : index
      %90 = vector.load %arg7[%c0_47, %c0_48] : memref<8x1xf32, #tpu.memory_space<vmem>>, vector<8x1xf32>
      tpu.vector_store %arg7[%c0_47, %c0_48], %89 {strides = array<i32>} : memref<8x1xf32, #tpu.memory_space<vmem>>, vector<8x1xf32>,
      %cst_49 = arith.constant -1.000000e+30 : f32
      %91 = vector.broadcast %cst_49 : f32 to vector<8x1xf32>
      %c0_50 = arith.constant 0 : index
      %c0_51 = arith.constant 0 : index
      %92 = vector.load %arg8[%c0_50, %c0_51] : memref<8x1xf32, #tpu.memory_space<vmem>>, vector<8x1xf32>
      tpu.vector_store %arg8[%c0_50, %c0_51], %91 {strides = array<i32>} : memref<8x1xf32, #tpu.memory_space<vmem>>, vector<8x1xf32>,
      %cst_52 = arith.constant 0.000000e+00 : f32
      %93 = vector.broadcast %cst_52 : f32 to vector<8x1xf32>
      %c0_53 = arith.constant 0 : index
      %c0_54 = arith.constant 0 : index
      %94 = vector.load %arg9[%c0_53, %c0_54] : memref<8x1xf32, #tpu.memory_space<vmem>>, vector<8x1xf32>
      tpu.vector_store %arg9[%c0_53, %c0_54], %93 {strides = array<i32>} : memref<8x1xf32, #tpu.memory_space<vmem>>, vector<8x1xf32>,
      %cst_55 = arith.constant 0.000000e+00 : f32
      %95 = vector.broadcast %cst_55 : f32 to vector<8x1xf32>
      %c0_56 = arith.constant 0 : index
      %c0_57 = arith.constant 0 : index
      %96 = vector.load %arg10[%c0_56, %c0_57] : memref<8x1xf32, #tpu.memory_space<vmem>>, vector<8x1xf32>
      tpu.vector_store %arg10[%c0_56, %c0_57], %95 {strides = array<i32>} : memref<8x1xf32, #tpu.memory_space<vmem>>, vector<8x1xf32>,
    } else {
    }
    %c0 = arith.constant 0 : index
    %c0_1 = arith.constant 0 : index
    %3 = vector.load %arg2[%c0, %c0_1] : memref<8x128xf32, #tpu.memory_space<vmem>>, vector<8x128xf32>
    %4 = arith.truncf %3 : vector<8x128xf32> to vector<8x128xbf16>
    %c0_2 = arith.constant 0 : index
    %c0_3 = arith.constant 0 : index
    %5 = vector.load %arg3[%c0_2, %c0_3] : memref<128x512xbf16, #tpu.memory_space<vmem>>, vector<128x512xbf16>
    %cst = arith.constant dense<0.000000e+00> : vector<8x512xf32>
    %6 = tpu.matmul %4, %5, %cst {dimension_numbers = #tpu.dot_dimension_numbers<[1], [0], [0], [1], [0, 0, 1, 1], [], []>} : vector<8x128xbf16>, vector<128x512xbf16>, vector<8x512xf32> -> vector<8x512xf32>
    %c0_4 = arith.constant 0 : index
    %c0_5 = arith.constant 0 : index
    %7 = vector.load %arg7[%c0_4, %c0_5] : memref<8x1xf32, #tpu.memory_space<vmem>>, vector<8x1xf32>
    %8 = vector.broadcast %7 : vector<8x1xf32> to vector<8x512xf32>
    %9 = arith.mulf %6, %8 : vector<8x512xf32>
    %c0_6 = arith.constant 0 : index
    %c0_7 = arith.constant 0 : index
    %10 = vector.load %arg4[%c0_6, %c0_7] : memref<1x512xf32, #tpu.memory_space<vmem>>, vector<1x512xf32>
    %11 = vector.broadcast %10 : vector<1x512xf32> to vector<8x512xf32>
    %12 = arith.mulf %9, %11 : vector<8x512xf32>
    %cst_8 = arith.constant -0.999989986 : f32
    %cst_9 = arith.constant 0.999989986 : f32
    %13 = vector.broadcast %cst_8 : f32 to vector<8x512xf32>
    %14 = arith.maximumf %13, %12 : vector<8x512xf32>
    %15 = vector.broadcast %cst_9 : f32 to vector<8x512xf32>
    %16 = arith.minimumf %15, %14 : vector<8x512xf32>
    %c512_i32 = arith.constant 512 : i32
    %17 = arith.muli %arg1, %c512_i32 : i32
    %18 = tpu.iota {dimensions = array<i32: 1>} : vector<8x512xi32>
    %19 = vector.broadcast %17 : i32 to vector<8x512xi32>
    %20 = arith.addi %19, %18 : vector<8x512xi32>
    %c0_10 = arith.constant 0 : index
    %c0_11 = arith.constant 0 : index
    %21 = vector.load %arg5[%c0_10, %c0_11] : memref<8x1xi32, #tpu.memory_space<vmem>>, vector<8x1xi32>
    %22 = vector.broadcast %21 : vector<8x1xi32> to vector<8x512xi32>
    %23 = arith.cmpi eq, %20, %22 : vector<8x512xi32>
    %c640_i32 = arith.constant 640 : i32
    %24 = vector.broadcast %c640_i32 : i32 to vector<8x512xi32>
    %25 = arith.cmpi slt, %20, %24 : vector<8x512xi32>
    %cst_12 = arith.constant 0.000000e+00 : f32
    %26 = vector.broadcast %cst_12 : f32 to vector<8x512xf32>
    %27 = arith.select %23, %16, %26 : vector<8x512xi1>, vector<8x512xf32>
    %cst_13 = arith.constant dense<0.000000e+00> : vector<8xf32>
    %28 = vector.multi_reduction <add>, %27, %cst_13 [1] : vector<8x512xf32> to vector<8xf32>
    %29 = vector.shape_cast %28 : vector<8xf32> to vector<8x1xf32>
    %30 = arith.mulf %29, %29 : vector<8x1xf32>
    %cst_14 = arith.constant 1.000000e+00 : f32
    %31 = vector.broadcast %cst_14 : f32 to vector<8x1xf32>
    %32 = arith.subf %31, %30 : vector<8x1xf32>
    %cst_15 = arith.constant 0.000000e+00 : f32
    %33 = vector.broadcast %cst_15 : f32 to vector<8x1xf32>
    %34 = arith.maximumf %32, %33 : vector<8x1xf32>
    %35 = math.sqrt %34 : vector<8x1xf32>
    %cst_16 = arith.constant 0.87758255 : f32
    %36 = vector.broadcast %cst_16 : f32 to vector<8x1xf32>
    %37 = arith.mulf %29, %36 : vector<8x1xf32>
    %cst_17 = arith.constant 0.47942555 : f32
    %38 = vector.broadcast %cst_17 : f32 to vector<8x1xf32>
    %39 = arith.mulf %35, %38 : vector<8x1xf32>
    %40 = arith.subf %37, %39 : vector<8x1xf32>
    %cst_18 = arith.constant -0.877581298 : f32
    %41 = vector.broadcast %cst_18 : f32 to vector<8x1xf32>
    %42 = arith.cmpf olt, %29, %41 : vector<8x1xf32>
    %cst_19 = arith.constant -1.000000e+00 : f32
    %43 = vector.broadcast %cst_19 : f32 to vector<8x1xf32>
    %44 = arith.select %42, %43, %40 : vector<8x1xi1>, vector<8x1xf32>
    %cst_20 = arith.constant 6.400000e+01 : f32
    %45 = vector.broadcast %cst_20 : f32 to vector<8x1xf32>
    %46 = arith.mulf %45, %44 : vector<8x1xf32>
    %cst_21 = arith.constant 6.400000e+01 : f32
    %47 = vector.broadcast %cst_21 : f32 to vector<8x512xf32>
    %48 = arith.mulf %47, %16 : vector<8x512xf32>
    %49 = vector.shape_cast %46 : vector<8x1xf32> to vector<8x1xf32>
    %50 = vector.broadcast %49 : vector<8x1xf32> to vector<8x512xf32>
    %51 = arith.select %23, %50, %48 : vector<8x512xi1>, vector<8x512xf32>
    %cst_22 = arith.constant -1.000000e+30 : f32
    %52 = vector.broadcast %cst_22 : f32 to vector<8x512xf32>
    %53 = arith.select %25, %51, %52 : vector<8x512xi1>, vector<8x512xf32>
    %c0_23 = arith.constant 0 : index
    %c0_24 = arith.constant 0 : index
    %54 = vector.load %arg8[%c0_23, %c0_24] : memref<8x1xf32, #tpu.memory_space<vmem>>, vector<8x1xf32>
    %cst_25 = arith.constant dense<0xFF800000> : vector<8xf32>
    %55 = vector.multi_reduction <maximumf>, %53, %cst_25 [1] : vector<8x512xf32> to vector<8xf32>
    %56 = vector.shape_cast %55 : vector<8xf32> to vector<8x1xf32>
    %57 = arith.maximumf %54, %56 : vector<8x1xf32>
    %c0_26 = arith.constant 0 : index
    %c0_27 = arith.constant 0 : index
    %58 = vector.load %arg8[%c0_26, %c0_27] : memref<8x1xf32, #tpu.memory_space<vmem>>, vector<8x1xf32>
    %59 = arith.subf %58, %57 : vector<8x1xf32>
    %60 = math.exp %59 : vector<8x1xf32>
    %c0_28 = arith.constant 0 : index
    %c0_29 = arith.constant 0 : index
    %61 = vector.load %arg9[%c0_28, %c0_29] : memref<8x1xf32, #tpu.memory_space<vmem>>, vector<8x1xf32>
    %62 = arith.mulf %60, %61 : vector<8x1xf32>
    %63 = vector.broadcast %57 : vector<8x1xf32> to vector<8x512xf32>
    %64 = arith.subf %53, %63 : vector<8x512xf32>
    %65 = math.exp %64 : vector<8x512xf32>
    %cst_30 = arith.constant dense<0.000000e+00> : vector<8xf32>
    %66 = vector.multi_reduction <add>, %65, %cst_30 [1] : vector<8x512xf32> to vector<8xf32>
    %67 = vector.shape_cast %66 : vector<8xf32> to vector<8x1xf32>
    %68 = arith.addf %62, %67 : vector<8x1xf32>
    %c0_31 = arith.constant 0 : index
    %c0_32 = arith.constant 0 : index
    %69 = vector.load %arg9[%c0_31, %c0_32] : memref<8x1xf32, #tpu.memory_space<vmem>>, vector<8x1xf32>
    tpu.vector_store %arg9[%c0_31, %c0_32], %68 {strides = array<i32>} : memref<8x1xf32, #tpu.memory_space<vmem>>, vector<8x1xf32>,
    %c0_33 = arith.constant 0 : index
    %c0_34 = arith.constant 0 : index
    %70 = vector.load %arg8[%c0_33, %c0_34] : memref<8x1xf32, #tpu.memory_space<vmem>>, vector<8x1xf32>
    tpu.vector_store %arg8[%c0_33, %c0_34], %57 {strides = array<i32>} : memref<8x1xf32, #tpu.memory_space<vmem>>, vector<8x1xf32>,
    %c0_35 = arith.constant 0 : index
    %c0_36 = arith.constant 0 : index
    %71 = vector.load %arg10[%c0_35, %c0_36] : memref<8x1xf32, #tpu.memory_space<vmem>>, vector<8x1xf32>
    %cst_37 = arith.constant 0.000000e+00 : f32
    %72 = vector.broadcast %cst_37 : f32 to vector<8x512xf32>
    %73 = arith.select %23, %53, %72 : vector<8x512xi1>, vector<8x512xf32>
    %cst_38 = arith.constant dense<0.000000e+00> : vector<8xf32>
    %74 = vector.multi_reduction <add>, %73, %cst_38 [1] : vector<8x512xf32> to vector<8xf32>
    %75 = vector.shape_cast %74 : vector<8xf32> to vector<8x1xf32>
    %76 = arith.addf %71, %75 : vector<8x1xf32>
    %c0_39 = arith.constant 0 : index
    %c0_40 = arith.constant 0 : index
    %77 = vector.load %arg10[%c0_39, %c0_40] : memref<8x1xf32, #tpu.memory_space<vmem>>, vector<8x1xf32>
    tpu.vector_store %arg10[%c0_39, %c0_40], %76 {strides = array<i32>} : memref<8x1xf32, #tpu.memory_space<vmem>>, vector<8x1xf32>,
    %c1_i32 = arith.constant 1 : i32
    %78 = arith.cmpi eq, %arg1, %c1_i32 : i32
    %79 = arith.extui %78 : i1 to i32
    %c0_i32_41 = arith.constant 0 : i32
    %80 = arith.cmpi ne, %79, %c0_i32_41 : i32
    scf.if %80 {
      %c0_42 = arith.constant 0 : index
      %c0_43 = arith.constant 0 : index
      %81 = vector.load %arg8[%c0_42, %c0_43] : memref<8x1xf32, #tpu.memory_space<vmem>>, vector<8x1xf32>
      %c0_44 = arith.constant 0 : index
      %c0_45 = arith.constant 0 : index
      %82 = vector.load %arg9[%c0_44, %c0_45] : memref<8x1xf32, #tpu.memory_space<vmem>>, vector<8x1xf32>
      %83 = math.log %82 : vector<8x1xf32>
      %84 = arith.addf %81, %83 : vector<8x1xf32>
      %c0_46 = arith.constant 0 : index
      %c0_47 = arith.constant 0 : index
      %85 = vector.load %arg10[%c0_46, %c0_47] : memref<8x1xf32, #tpu.memory_space<vmem>>, vector<8x1xf32>
      %86 = arith.subf %84, %85 : vector<8x1xf32>
      %c0_48 = arith.constant 0 : index
      %c0_49 = arith.constant 0 : index
      %87 = vector.load %arg6[%c0_48, %c0_49] : memref<8x1xf32, #tpu.memory_space<vmem>>, vector<8x1xf32>
      tpu.vector_store %arg6[%c0_48, %c0_49], %86 {strides = array<i32>} : memref<8x1xf32, #tpu.memory_space<vmem>>, vector<8x1xf32>,
    } else {
    }
    return
  }
  func.func @transform_0(%arg0: i32, %arg1: i32) -> (i32, i32) {
    %c0_i32 = arith.constant 0 : i32
    %c0_i32_0 = arith.constant 0 : i32
    return %arg0, %c0_i32 : i32, i32
  }
  func.func @transform_1(%arg0: i32, %arg1: i32) -> (i32, i32) {
    %c0_i32 = arith.constant 0 : i32
    %c0_i32_0 = arith.constant 0 : i32
    return %c0_i32, %arg1 : i32, i32
  }
  func.func @transform_2(%arg0: i32, %arg1: i32) -> (i32, i32) {
    %c0_i32 = arith.constant 0 : i32
    %c0_i32_0 = arith.constant 0 : i32
    return %c0_i32, %arg1 : i32, i32
  }
  func.func @transform_3(%arg0: i32, %arg1: i32) -> (i32, i32) {
    %c0_i32 = arith.constant 0 : i32
    %c0_i32_0 = arith.constant 0 : i32
    return %arg0, %c0_i32 : i32, i32
  }
  func.func @transform_4(%arg0: i32, %arg1: i32) -> (i32, i32) {
    %c0_i32 = arith.constant 0 : i32
    %c0_i32_0 = arith.constant 0 : i32
    return %arg0, %c0_i32 : i32, i32
  }
}

</mosaic_0001>

<llo_original>
// kernel: arcface_loss.1
$region0: #{arcface_loss.1}
  #allocation0 [shape = 'u32[]', space=smem, size = 0x4, offset = 0x4, fixed_abs, tag = 'smem constant byte address 0x4 - core index']
  #allocation1 [shape = 'u32[144,128]{1,0:T(1,128)}', space=vmem, size = 0x12000, scoped, tag = 'internal scratch']
  #allocation2 [shape = 'f32[8,1]{1,0:T(8,128)}', space=vmem, size = 0x1000, scoped, tag = 'scratch operand']
  #allocation3 [shape = 'f32[8,1]{1,0:T(8,128)}', space=vmem, size = 0x1000, scoped, tag = 'scratch operand']
  #allocation4 [shape = 'f32[8,1]{1,0:T(8,128)}', space=vmem, size = 0x1000, scoped, tag = 'scratch operand']
  #allocation5 [shape = 'f32[8,1]{1,0:T(8,128)}', space=vmem, size = 0x1000, scoped, tag = 'scratch operand']
  %s0 = inlined_call_operand.vmem [shape: f32[8,128], index: 0, kind: input, shape index: {}]
  %s1 = inlined_call_operand.vmem [shape: bf16[128,1024], index: 1, kind: input, shape index: {}]
  %s2 = inlined_call_operand.vmem [shape: f32[1,1024], index: 2, kind: input, shape index: {}]
  %s3 = inlined_call_operand.vmem [shape: s32[8,1], index: 3, kind: input, shape index: {}]
  %s4 = inlined_call_operand.vmem [shape: f32[8,1], index: 4, kind: output, shape index: {}]
  %s5 = sld [smem:[#allocation0]]
  $region80: #{arcface_loss.1} parent=0
    _
  %s7 = ssub.s32 1, %s5
  %s8 = scalar_select 0, %s7, %s5
  $region1: #{arcface_loss.1} parent=0
    #allocation6 [shape = 'u8[262144]{0}', space=vmem, size = 0x40000, scoped, tag = 'input window, operand 1']
    loop: start=0, step=1, limit=4
    $region2: #{arcface_loss.1} parent=1 // loop_pre_header
      _
    $region3: #{arcface_loss.1} parent=1 // loop_header
      %s10 = sphi 0, %s14
      %p11 = scmp.ge.s32.totalorder %s10, 4
      %s17 = sphi 0, %s29
      %s18 = sphi 0, %s25
      %s19 = sphi 0, %s17
      %s20 = sphi 0, %s18
      %s21 = sphi 0, %s19
      %s22 = sphi 0, %s20
      %s32 = sphi 0, %s34
      %s35 = sphi 0, %s32
      %s36 = sphi 0, %s35
      %s52 = sphi 0, %s36
      %s58 = sphi 0, %s60
      %s61 = sphi 0, %s58
      %s62 = sphi 0, %s61
      %s78 = sphi 0, %s62
      %s84 = sphi 0, %s86
      %s87 = sphi 0, %s84
      %s88 = sphi 0, %s87
      %s104 = sphi 0, %s88
      %s110 = sphi 0, %s112
      %s113 = sphi 0, %s110
      %s114 = sphi 0, %s113
      %s130 = sphi 0, %s114
      %s136 = sphi 0, %s138
      %s139 = sphi 0, %s136
      %s140 = sphi 0, %s139
      %s156 = sphi 0, %s140
    $region4: #{arcface_loss.1} parent=1 // loop_header_branch
      %13 = sbr.rel (%p11) target = $region8
    $region5: #{arcface_loss.1} parent=1 // loop_body
      %s15 = ssub.s32 %s10, 1
      %s16 = ssub.s32 %s10, 2
      %s23 = sadd.s32 1, %s18
      %p24 = scmp.ge.s32.totalorder %s23, 2
      %s25 = scalar_select %p24, 0, %s23
      %s26 = sadd.s32 1, %s17
      %s27 = scalar_select %p24, %s26, %s17
      %p28 = scmp.ge.s32.totalorder %s27, 1
      %s29 = scalar_select %p28, 0, %s27
      %s30 = ssub.s32 %s17, %s29
      %p31 = scmp.eq.s32.totalorder %s30, 0
      %s33 = sadd.s32 %s32, 1
      %s34 = scalar_select %p31, %s32, %s33
      %p37 = pneg %p31
      %p38 = scmp.eq.s32.totalorder %s10, 1
      %p39 = por %p37, %p38
      %p40 = scmp.ne.s32.totalorder %s32, %s35
      %p41 = scmp.eq.s32.totalorder %s10, 0
      %p42 = por %p40, %p41
      %p43 = scmp.ne.s32.totalorder %s32, %s35
      %p44 = scmp.eq.s32.totalorder %s15, 1
      %p45 = por %p43, %p44
      %p46 = scmp.ne.s32.totalorder %s35, %s36
      %p47 = scmp.eq.s32.totalorder %s15, 0
      %p48 = por %p46, %p47
      %p49 = scmp.ne.s32.totalorder %s35, %s36
      %p50 = scmp.eq.s32.totalorder %s16, 1
      %p51 = por %p49, %p50
      %p53 = scmp.ne.s32.totalorder %s36, %s52
      %p54 = scmp.eq.s32.totalorder %s16, 0
      %p55 = por %p53, %p54
      %s56 = ssub.s32 %s18, %s25
      %p57 = scmp.eq.s32.totalorder %s56, 0
      %s59 = sadd.s32 %s58, 1
      %s60 = scalar_select %p57, %s58, %s59
      %p63 = pneg %p57
      %p64 = scmp.eq.s32.totalorder %s10, 1
      %p65 = por %p63, %p64
      %p66 = scmp.ne.s32.totalorder %s58, %s61
      %p67 = scmp.eq.s32.totalorder %s10, 0
      %p68 = por %p66, %p67
      %p69 = scmp.ne.s32.totalorder %s58, %s61
      %p70 = scmp.eq.s32.totalorder %s15, 1
      %p71 = por %p69, %p70
      %p72 = scmp.ne.s32.totalorder %s61, %s62
      %p73 = scmp.eq.s32.totalorder %s15, 0
      %p74 = por %p72, %p73
      %p75 = scmp.ne.s32.totalorder %s61, %s62
      %p76 = scmp.eq.s32.totalorder %s16, 1
      %p77 = por %p75, %p76
      %p79 = scmp.ne.s32.totalorder %s62, %s78
      %p80 = scmp.eq.s32.totalorder %s16, 0
      %p81 = por %p79, %p80
      %s82 = ssub.s32 %s18, %s25
      %p83 = scmp.eq.s32.totalorder %s82, 0
      %s85 = sadd.s32 %s84, 1
      %s86 = scalar_select %p83, %s84, %s85
      %p89 = pneg %p83
      %p90 = scmp.eq.s32.totalorder %s10, 1
      %p91 = por %p89, %p90
      %p92 = scmp.ne.s32.totalorder %s84, %s87
      %p93 = scmp.eq.s32.totalorder %s10, 0
      %p94 = por %p92, %p93
      %p95 = scmp.ne.s32.totalorder %s84, %s87
      %p96 = scmp.eq.s32.totalorder %s15, 1
      %p97 = por %p95, %p96
      %p98 = scmp.ne.s32.totalorder %s87, %s88
      %p99 = scmp.eq.s32.totalorder %s15, 0
      %p100 = por %p98, %p99
      %p101 = scmp.ne.s32.totalorder %s87, %s88
      %p102 = scmp.eq.s32.totalorder %s16, 1
      %p103 = por %p101, %p102
      %p105 = scmp.ne.s32.totalorder %s88, %s104
      %p106 = scmp.eq.s32.totalorder %s16, 0
      %p107 = por %p105, %p106
      %s108 = ssub.s32 %s17, %s29
      %p109 = scmp.eq.s32.totalorder %s108, 0
      %s111 = sadd.s32 %s110, 1
      %s112 = scalar_select %p109, %s110, %s111
      %p115 = pneg %p109
      %p116 = scmp.eq.s32.totalorder %s10, 1
      %p117 = por %p115, %p116
      %p118 = scmp.ne.s32.totalorder %s110, %s113
      %p119 = scmp.eq.s32.totalorder %s10, 0
      %p120 = por %p118, %p119
      %p121 = scmp.ne.s32.totalorder %s110, %s113
      %p122 = scmp.eq.s32.totalorder %s15, 1
      %p123 = por %p121, %p122
      %p124 = scmp.ne.s32.totalorder %s113, %s114
      %p125 = scmp.eq.s32.totalorder %s15, 0
      %p126 = por %p124, %p125
      %p127 = scmp.ne.s32.totalorder %s113, %s114
      %p128 = scmp.eq.s32.totalorder %s16, 1
      %p129 = por %p127, %p128
      %p131 = scmp.ne.s32.totalorder %s114, %s130
      %p132 = scmp.eq.s32.totalorder %s16, 0
      %p133 = por %p131, %p132
      %s134 = ssub.s32 %s17, %s29
      %p135 = scmp.eq.s32.totalorder %s134, 0
      %s137 = sadd.s32 %s136, 1
      %s138 = scalar_select %p135, %s136, %s137
      %p141 = pneg %p135
      %p142 = scmp.eq.s32.totalorder %s10, 1
      %p143 = por %p141, %p142
      %p144 = scmp.ne.s32.totalorder %s136, %s139
      %p145 = scmp.eq.s32.totalorder %s10, 0
      %p146 = por %p144, %p145
      %p147 = scmp.ne.s32.totalorder %s136, %s139
      %p148 = scmp.eq.s32.totalorder %s15, 1
      %p149 = por %p147, %p148
      %p150 = scmp.ne.s32.totalorder %s139, %s140
      %p151 = scmp.eq.s32.totalorder %s15, 0
      %p152 = por %p150, %p151
      %p153 = scmp.ne.s32.totalorder %s139, %s140
      %p154 = scmp.eq.s32.totalorder %s16, 1
      %p155 = por %p153, %p154
      %p157 = scmp.ne.s32.totalorder %s140, %s156
      %p158 = scmp.eq.s32.totalorder %s16, 0
      %p159 = por %p157, %p158
      %p160 = scmp.le.s32.totalorder 1, %s10
      %p161 = scmp.lt.s32.totalorder %s10, 3
      %p162 = pnand %p160, %p161
      %p163 = pneg %p162
      // Predicated region
      $region9: #{arcface_loss.1} parent=5 // pred_check
        _
      $region10: #{arcface_loss.1} parent=5 // pred_check_branch
        %165 = sbr.rel (%p162) target = $region12
      $region11: #{arcface_loss.1} parent=5 // pred_region
        %s166 = ssub.s32 %s10, 1
        // Predicated region
        $region13: #{arcface_loss.1} parent=11 // pred_check
          %p167 = pneg %p48
        $region14: #{arcface_loss.1} parent=11 // pred_check_branch
          %169 = sbr.rel (%p167) target = $region16
        $region15: #{arcface_loss.1} parent=11 // pred_region
          %p170 = scmp.lt.s32.totalorder %s19, 0
          %s171 = scalar_select %p170, %s19, 0
          %s172 = smul.addr %s171, 8
          %s173 = scalar_lea.vmem %s0, %s172
        $region16: #{arcface_loss.1} parent=11 // pred_fallthru
          _
        // Predicated region
        $region17: #{arcface_loss.1} parent=11 // pred_check
          %p174 = pneg %p126
        $region18: #{arcface_loss.1} parent=11 // pred_check_branch
          %176 = sbr.rel (%p174) target = $region20
        $region19: #{arcface_loss.1} parent=11 // pred_region
          %p177 = scmp.lt.s32.totalorder %s19, 0
          %s178 = scalar_select %p177, %s19, 0
          %s179 = smul.addr %s178, 8
          %s180 = scalar_lea.vmem %s3, %s179
        $region20: #{arcface_loss.1} parent=11 // pred_fallthru
          _
      $region12: #{arcface_loss.1} parent=5 // pred_fallthru
        _
      %p181 = scmp.lt.s32.totalorder %s10, 2
      // Predicated region
      $region21: #{arcface_loss.1} parent=5 // pred_check
        %p182 = pneg %p181
      $region22: #{arcface_loss.1} parent=5 // pred_check_branch
        %184 = sbr.rel (%p182) target = $region24
      $region23: #{arcface_loss.1} parent=5 // pred_region
        // Predicated region
        $region25: #{arcface_loss.1} parent=23 // pred_check
          %p185 = pneg %p68
        $region26: #{arcface_loss.1} parent=23 // pred_check_branch
          %187 = sbr.rel (%p185) target = $region28
        $region27: #{arcface_loss.1} parent=23 // pred_region
          %s188 = sand.u32 %s58, 1
          %s189 = sand.u32 %s58, 1
          %s190 = smul.addr %s189, 256
          %s191 = scalar_lea.vmem [#allocation6], %s190
          %s192 = smul.u32 4, %s18
          %s193 = smul.addr %s192, 4
          %s194 = scalar_lea.vmem %s1, %s193
          // Predicated region
          $region29: #{arcface_loss.1} parent=27 // pred_check
            _
          $region30: #{arcface_loss.1} parent=27 // pred_check_branch
            %196 = sbr.rel (0) target = $region32
          $region31: #{arcface_loss.1} parent=27 // pred_region
            // Predicated region
            $region33: #{arcface_loss.1} parent=31 // pred_check
              _
            $region34: #{arcface_loss.1} parent=31 // pred_check_branch
              %198 = sbr.rel (0) target = $region36
            $region35: #{arcface_loss.1} parent=31 // pred_region
              loop: start=0, step=1, limit=1
              $region37: #{arcface_loss.1} parent=35 // loop_pre_header
                _
              $region38: #{arcface_loss.1} parent=35 // loop_header
                %s200 = sphi 0, %s204
                %p201 = scmp.ge.s32.totalorder %s200, 1
                %s205 = sphi %s194, %s194
                %s206 = sphi %s191, %s191
              $region39: #{arcface_loss.1} parent=35 // loop_header_branch
                %203 = sbr.rel (%p201) target = $region43
              $region40: #{arcface_loss.1} parent=35 // loop_body
                %v207 = vld [vmem:[%s205] sm:$0xff]
                %208 = vst [vmem:[%s206] sm:$0xff] %v207
                %v209 = vld [vmem:[%s205 + $0x8] sm:$0xff]
                %210 = vst [vmem:[%s206 + $0x8] sm:$0xff] %v209
                %v211 = vld [vmem:[%s205 + $0x20] sm:$0xff]
                %212 = vst [vmem:[%s206 + $0x10] sm:$0xff] %v211
                %v213 = vld [vmem:[%s205 + $0x28] sm:$0xff]
                %214 = vst [vmem:[%s206 + $0x18] sm:$0xff] %v213
                %v215 = vld [vmem:[%s205 + $0x40] sm:$0xff]
                %216 = vst [vmem:[%s206 + $0x20] sm:$0xff] %v215
                %v217 = vld [vmem:[%s205 + $0x48] sm:$0xff]
                %218 = vst [vmem:[%s206 + $0x28] sm:$0xff] %v217
                %v219 = vld [vmem:[%s205 + $0x60] sm:$0xff]
                %220 = vst [vmem:[%s206 + $0x30] sm:$0xff] %v219
                %v221 = vld [vmem:[%s205 + $0x68] sm:$0xff]
                %222 = vst [vmem:[%s206 + $0x38] sm:$0xff] %v221
                %v223 = vld [vmem:[%s205 + $0x80] sm:$0xff]
                %224 = vst [vmem:[%s206 + $0x40] sm:$0xff] %v223
                %v225 = vld [vmem:[%s205 + $0x88] sm:$0xff]
                %226 = vst [vmem:[%s206 + $0x48] sm:$0xff] %v225
                %v227 = vld [vmem:[%s205 + $0xa0] sm:$0xff]
                %228 = vst [vmem:[%s206 + $0x50] sm:$0xff] %v227
                %v229 = vld [vmem:[%s205 + $0xa8] sm:$0xff]
                %230 = vst [vmem:[%s206 + $0x58] sm:$0xff] %v229
                %v231 = vld [vmem:[%s205 + $0xc0] sm:$0xff]
                %232 = vst [vmem:[%s206 + $0x60] sm:$0xff] %v231
                %v233 = vld [vmem:[%s205 + $0xc8] sm:$0xff]
                %234 = vst [vmem:[%s206 + $0x68] sm:$0xff] %v233
                %v235 = vld [vmem:[%s205 + $0xe0] sm:$0xff]
                %236 = vst [vmem:[%s206 + $0x70] sm:$0xff] %v235
                %v237 = vld [vmem:[%s205 + $0xe8] sm:$0xff]
                %238 = vst [vmem:[%s206 + $0x78] sm:$0xff] %v237
                %v239 = vld [vmem:[%s205 + $0x100] sm:$0xff]
                %240 = vst [vmem:[%s206 + $0x80] sm:$0xff] %v239
                %v241 = vld [vmem:[%s205 + $0x108] sm:$0xff]
                %242 = vst [vmem:[%s206 + $0x88] sm:$0xff] %v241
                %v243 = vld [vmem:[%s205 + $0x120] sm:$0xff]
                %244 = vst [vmem:[%s206 + $0x90] sm:$0xff] %v243
                %v245 = vld [vmem:[%s205 + $0x128] sm:$0xff]
                %246 = vst [vmem:[%s206 + $0x98] sm:$0xff] %v245
                %v247 = vld [vmem:[%s205 + $0x140] sm:$0xff]
                %248 = vst [vmem:[%s206 + $0xa0] sm:$0xff] %v247
                %v249 = vld [vmem:[%s205 + $0x148] sm:$0xff]
                %250 = vst [vmem:[%s206 + $0xa8] sm:$0xff] %v249
                %v251 = vld [vmem:[%s205 + $0x160] sm:$0xff]
                %252 = vst [vmem:[%s206 + $0xb0] sm:$0xff] %v251
                %v253 = vld [vmem:[%s205 + $0x168] sm:$0xff]
                %254 = vst [vmem:[%s206 + $0xb8] sm:$0xff] %v253
                %v255 = vld [vmem:[%s205 + $0x180] sm:$0xff]
                %256 = vst [vmem:[%s206 + $0xc0] sm:$0xff] %v255
                %v257 = vld [vmem:[%s205 + $0x188] sm:$0xff]
                %258 = vst [vmem:[%s206 + $0xc8] sm:$0xff] %v257
                %v259 = vld [vmem:[%s205 + $0x1a0] sm:$0xff]
                %260 = vst [vmem:[%s206 + $0xd0] sm:$0xff] %v259
                %v261 = vld [vmem:[%s205 + $0x1a8] sm:$0xff]
                %262 = vst [vmem:[%s206 + $0xd8] sm:$0xff] %v261
                %v263 = vld [vmem:[%s205 + $0x1c0] sm:$0xff]
                %264 = vst [vmem:[%s206 + $0xe0] sm:$0xff] %v263
                %v265 = vld [vmem:[%s205 + $0x1c8] sm:$0xff]
                %266 = vst [vmem:[%s206 + $0xe8] sm:$0xff] %v265
                %v267 = vld [vmem:[%s205 + $0x1e0] sm:$0xff]
                %268 = vst [vmem:[%s206 + $0xf0] sm:$0xff] %v267
                %v269 = vld [vmem:[%s205 + $0x1e8] sm:$0xff]
                %270 = vst [vmem:[%s206 + $0xf8] sm:$0xff] %v269
              $region41: #{arcface_loss.1} parent=35 // loop_footer
                %s204 = sadd.s32 1, %s200
              $region42: #{arcface_loss.1} parent=35 // loop_footer_branch
                %199 = sbr.rel target = $region38
              $region43: #{arcface_loss.1} parent=35 // loop_exit
                _
            $region36: #{arcface_loss.1} parent=31 // pred_fallthru
              _
            // Predicated region
            $region44: #{arcface_loss.1} parent=31 // pred_check
              _
            $region45: #{arcface_loss.1} parent=31 // pred_check_branch
              %272 = sbr.rel target = $region47
            $region46: #{arcface_loss.1} parent=31 // pred_region
              _
            $region47: #{arcface_loss.1} parent=31 // pred_fallthru
              _
          $region32: #{arcface_loss.1} parent=27 // pred_fallthru
            _
          %273 = vnop
        $region28: #{arcface_loss.1} parent=23 // pred_fallthru
          _
        // Predicated region
        $region48: #{arcface_loss.1} parent=23 // pred_check
          %p274 = pneg %p94
        $region49: #{arcface_loss.1} parent=23 // pred_check_branch
          %276 = sbr.rel (%p274) target = $region51
        $region50: #{arcface_loss.1} parent=23 // pred_region
          %s277 = smul.u32 4, %s18
          %p278 = scmp.lt.s32.totalorder %s277, 7
          %s279 = scalar_select %p278, %s277, 7
          %s280 = scalar_lea.vmem %s2, %s279
          %s281 = smul.u32 4, %s18
        $region51: #{arcface_loss.1} parent=23 // pred_fallthru
          _
      $region24: #{arcface_loss.1} parent=5 // pred_fallthru
        _
      %p282 = scmp.le.s32.totalorder 1, %s10
      %p283 = scmp.lt.s32.totalorder %s10, 3
      %p284 = pnand %p282, %p283
      %p285 = pneg %p284
      // Predicated region
      $region52: #{arcface_loss.1} parent=5 // pred_check
        _
      $region53: #{arcface_loss.1} parent=5 // pred_check_branch
        %287 = sbr.rel (%p284) target = $region55
      $region54: #{arcface_loss.1} parent=5 // pred_region
        %s288 = ssub.s32 %s10, 1
        %s289 = sand.u32 %s61, 1
        %s290 = sand.u32 %s61, 1
        %s291 = smul.addr %s290, 256
        %s292 = scalar_lea.vmem [#allocation6], %s291
        // Predicated region
        $region56: #{arcface_loss.1} parent=54 // pred_check
          %p293 = pneg %p74
        $region57: #{arcface_loss.1} parent=54 // pred_check_branch
          %295 = sbr.rel (%p293) target = $region59
        $region58: #{arcface_loss.1} parent=54 // pred_region
          _
        $region59: #{arcface_loss.1} parent=54 // pred_fallthru
          _
        %p296 = scmp.lt.s32.totalorder %s19, 0
        %s297 = scalar_select %p296, %s19, 0
        %s298 = smul.addr %s297, 8
        %s299 = scalar_lea.vmem %s0, %s298
        %p300 = pneg %p48
        %p301 = pneg %p45
        %s302 = sand.u32 %s61, 1
        %s303 = sand.u32 %s61, 1
        %s304 = smul.addr %s303, 256
        %s305 = scalar_lea.vmem [#allocation6], %s304
        %p306 = pneg %p74
        %p307 = pneg %p71
        %s308 = smul.u32 4, %s20
        %p309 = scmp.lt.s32.totalorder %s308, 7
        %s310 = scalar_select %p309, %s308, 7
        %s311 = scalar_lea.vmem %s2, %s310
        %p312 = pneg %p100
        %p313 = pneg %p97
        %p314 = scmp.lt.s32.totalorder %s19, 0
        %s315 = scalar_select %p314, %s19, 0
        %s316 = smul.addr %s315, 8
        %s317 = scalar_lea.vmem %s3, %s316
        %p318 = pneg %p126
        %p319 = pneg %p123
        %p320 = pneg %p152
        %p321 = pneg %p149
        %p322 = scmp.lt.s32.totalorder %s19, 0
        %s323 = scalar_select %p322, %s19, 0
        %s324 = smul.addr %s323, 8
        %s325 = scalar_lea.vmem %s4, %s324
        %p326 = scmp.lt.s32.totalorder %s19, 0
        %s327 = scalar_select %p326, %s19, 0
        %s328 = smul.addr %s327, 8
        %s329 = scalar_lea.vmem %s0, %s328
        %s330 = smul.u32 4, %s20
        %s331 = smul.u32 4, %s20
        %p332 = scmp.lt.s32.totalorder %s331, 7
        %s333 = scalar_select %p332, %s331, 7
        %s334 = scalar_lea.vmem %s2, %s333
        %s335 = smul.u32 4, %s20
        %p336 = scmp.lt.s32.totalorder %s19, 0
        %s337 = scalar_select %p336, %s19, 0
        %s338 = smul.addr %s337, 8
        %s339 = scalar_lea.vmem %s3, %s338
        %p340 = scmp.lt.s32.totalorder %s19, 0
        %s341 = scalar_select %p340, %s19, 0
        %s342 = smul.addr %s341, 8
        %s343 = scalar_lea.vmem %s4, %s342
        %p345 = scmp.eq.s32.totalorder %s20, 0
        // Predicated region
        $region60: #{arcface_loss.1} parent=54 // pred_check
          %p346 = pneg %p345
        $region61: #{arcface_loss.1} parent=54 // pred_check_branch
          %348 = sbr.rel (%p346) target = $region63
        $region62: #{arcface_loss.1} parent=54 // pred_region
          %v349 = vld [vmem:[%s329] sm:$0xff]
          %v350 = vmul.f32 %v349, %v349
          %351 = vadd.xlane.f32.xlu0 %v350
          %v352 = vpop.xlane.xlu0 %351
          %v353 = vrsqrt.pop %v352
          %v354 = vmul.f32 %v352, %v353
          %vm355 = vcmp.eq.f32.partialorder %v352, inf
          %v356 = vsel %vm355, %v352, %v354
          %vm357 = vcmp.eq.f32.partialorder %v352, 0.0
          %v358 = vand.u32 %v352, 2147483648
          %v359 = vsel %vm357, %v358, %v356
          %v360 = vmax.f32 %v359, 1e-12
          %v361 = vrcp.pop %v360
          %v362 = vmul.f32 1.0, %v361
          %vm363 = vcmask 7168
          %364 = vst.msk [vmem:[#allocation2] sm:$0xff] %vm363, %v362
          %365 = vst.msk [vmem:[#allocation3] sm:$0xff] %vm363, -1e+30
          %366 = vst.msk [vmem:[#allocation4] sm:$0xff] %vm363, 0.0
          %367 = vst.msk [vmem:[#allocation5] sm:$0xff] %vm363, 0.0
        $region63: #{arcface_loss.1} parent=54 // pred_fallthru
          _
        %v368 = vld [vmem:[%s329] sm:$0xff]
        %v369 = vpack.c.bf16 %v368, %v368
        %v370 = vld [vmem:[%s292] sm:$0xff]
        %v371 = vld [vmem:[%s292 + $0x8] sm:$0xff]
        %v372 = vld [vmem:[%s292 + $0x10] sm:$0xff]
        %v373 = vld [vmem:[%s292 + $0x18] sm:$0xff]
        %v374 = vld [vmem:[%s292 + $0x20] sm:$0xff]
        %v375 = vld [vmem:[%s292 + $0x28] sm:$0xff]
        %v376 = vld [vmem:[%s292 + $0x30] sm:$0xff]
        %v377 = vld [vmem:[%s292 + $0x38] sm:$0xff]
        %v378 = vld [vmem:[%s292 + $0x40] sm:$0xff]
        %v379 = vld [vmem:[%s292 + $0x48] sm:$0xff]
        %v380 = vld [vmem:[%s292 + $0x50] sm:$0xff]
        %v381 = vld [vmem:[%s292 + $0x58] sm:$0xff]
        %v382 = vld [vmem:[%s292 + $0x60] sm:$0xff]
        %v383 = vld [vmem:[%s292 + $0x68] sm:$0xff]
        %v384 = vld [vmem:[%s292 + $0x70] sm:$0xff]
        %v385 = vld [vmem:[%s292 + $0x78] sm:$0xff]
        %v386 = vld [vmem:[%s292 + $0x80] sm:$0xff]
        %v387 = vld [vmem:[%s292 + $0x88] sm:$0xff]
        %v388 = vld [vmem:[%s292 + $0x90] sm:$0xff]
        %v389 = vld [vmem:[%s292 + $0x98] sm:$0xff]
        %v390 = vld [vmem:[%s292 + $0xa0] sm:$0xff]
        %v391 = vld [vmem:[%s292 + $0xa8] sm:$0xff]
        %v392 = vld [vmem:[%s292 + $0xb0] sm:$0xff]
        %v393 = vld [vmem:[%s292 + $0xb8] sm:$0xff]
        %v394 = vld [vmem:[%s292 + $0xc0] sm:$0xff]
        %v395 = vld [vmem:[%s292 + $0xc8] sm:$0xff]
        %v396 = vld [vmem:[%s292 + $0xd0] sm:$0xff]
        %v397 = vld [vmem:[%s292 + $0xd8] sm:$0xff]
        %v398 = vld [vmem:[%s292 + $0xe0] sm:$0xff]
        %v399 = vld [vmem:[%s292 + $0xe8] sm:$0xff]
        %v400 = vld [vmem:[%s292 + $0xf0] sm:$0xff]
        %v401 = vld [vmem:[%s292 + $0xf8] sm:$0xff]
        %v434 = vunpack.c.l.b16 %v370
        %v435 = vunpack.c.h.b16 %v370
        %v436 = vunpack.c.l.b16 %v371
        %v437 = vunpack.c.h.b16 %v371
        %v438 = vunpack.c.l.b16 %v372
        %v439 = vunpack.c.h.b16 %v372
        %v440 = vunpack.c.l.b16 %v373
        %v441 = vunpack.c.h.b16 %v373
        %v442 = vunpack.c.l.b16 %v374
        %v443 = vunpack.c.h.b16 %v374
        %v444 = vunpack.c.l.b16 %v375
        %v445 = vunpack.c.h.b16 %v375
        %v446 = vunpack.c.l.b16 %v376
        %v447 = vunpack.c.h.b16 %v376
        %v448 = vunpack.c.l.b16 %v377
        %v449 = vunpack.c.h.b16 %v377
        %v450 = vunpack.c.l.b16 %v378
        %v451 = vunpack.c.h.b16 %v378
        %v452 = vunpack.c.l.b16 %v379
        %v453 = vunpack.c.h.b16 %v379
        %v454 = vunpack.c.l.b16 %v380
        %v455 = vunpack.c.h.b16 %v380
        %v456 = vunpack.c.l.b16 %v381
        %v457 = vunpack.c.h.b16 %v381
        %v458 = vunpack.c.l.b16 %v382
        %v459 = vunpack.c.h.b16 %v382
        %v460 = vunpack.c.l.b16 %v383
        %v461 = vunpack.c.h.b16 %v383
        %v462 = vunpack.c.l.b16 %v384
        %v463 = vunpack.c.h.b16 %v384
        %v464 = vunpack.c.l.b16 %v385
        %v465 = vunpack.c.h.b16 %v385
        %v466 = vunpack.c.l.b16 %v386
        %v467 = vunpack.c.h.b16 %v386
        %v468 = vunpack.c.l.b16 %v387
        %v469 = vunpack.c.h.b16 %v387
        %v470 = vunpack.c.l.b16 %v388
        %v471 = vunpack.c.h.b16 %v388
        %v472 = vunpack.c.l.b16 %v389
        %v473 = vunpack.c.h.b16 %v389
        %v474 = vunpack.c.l.b16 %v390
        %v475 = vunpack.c.h.b16 %v390
        %v476 = vunpack.c.l.b16 %v391
        %v477 = vunpack.c.h.b16 %v391
        %v478 = vunpack.c.l.b16 %v392
        %v479 = vunpack.c.h.b16 %v392
        %v480 = vunpack.c.l.b16 %v393
        %v481 = vunpack.c.h.b16 %v393
        %v482 = vunpack.c.l.b16 %v394
        %v483 = vunpack.c.h.b16 %v394
        %v484 = vunpack.c.l.b16 %v395
        %v485 = vunpack.c.h.b16 %v395
        %v486 = vunpack.c.l.b16 %v396
        %v487 = vunpack.c.h.b16 %v396
        %v488 = vunpack.c.l.b16 %v397
        %v489 = vunpack.c.h.b16 %v397
        %v490 = vunpack.c.l.b16 %v398
        %v491 = vunpack.c.h.b16 %v398
        %v492 = vunpack.c.l.b16 %v399
        %v493 = vunpack.c.h.b16 %v399
        %v494 = vunpack.c.l.b16 %v400
        %v495 = vunpack.c.h.b16 %v400
        %v496 = vunpack.c.l.b16 %v401
        %v497 = vunpack.c.h.b16 %v401
        %v498 = vpack.c.b16 %v438, %v434
        %v499 = vpack.c.b16 %v439, %v435
        %v500 = vpack.c.b16 %v440, %v436
        %v501 = vpack.c.b16 %v441, %v437
        %v502 = vpack.c.b16 %v446, %v442
        %v503 = vpack.c.b16 %v447, %v443
        %v504 = vpack.c.b16 %v448, %v444
        %v505 = vpack.c.b16 %v449, %v445
        %v506 = vpack.c.b16 %v454, %v450
        %v507 = vpack.c.b16 %v455, %v451
        %v508 = vpack.c.b16 %v456, %v452
        %v509 = vpack.c.b16 %v457, %v453
        %v510 = vpack.c.b16 %v462, %v458
        %v511 = vpack.c.b16 %v463, %v459
        %v512 = vpack.c.b16 %v464, %v460
        %v513 = vpack.c.b16 %v465, %v461
        %v514 = vpack.c.b16 %v470, %v466
        %v515 = vpack.c.b16 %v471, %v467
        %v516 = vpack.c.b16 %v472, %v468
        %v517 = vpack.c.b16 %v473, %v469
        %v518 = vpack.c.b16 %v478, %v474
        %v519 = vpack.c.b16 %v479, %v475
        %v520 = vpack.c.b16 %v480, %v476
        %v521 = vpack.c.b16 %v481, %v477
        %v522 = vpack.c.b16 %v486, %v482
        %v523 = vpack.c.b16 %v487, %v483
        %v524 = vpack.c.b16 %v488, %v484
        %v525 = vpack.c.b16 %v489, %v485
        %v526 = vpack.c.b16 %v494, %v490
        %v527 = vpack.c.b16 %v495, %v491
        %v528 = vpack.c.b16 %v496, %v492
        %v529 = vpack.c.b16 %v497, %v493
        %562 = vmatprep.subr.bf16.mxu0 %v499
        %563 = vmatpush1.bf16.msra.mxu0 %v498
        %564 = vmatprep.subr.bf16.mxu0 %v503
        %565 = vmatpush1.bf16.msra.mxu0 %v502
        %566 = vmatprep.subr.bf16.mxu0 %v507
        %567 = vmatpush1.bf16.msra.mxu0 %v506
        %568 = vmatprep.subr.bf16.mxu0 %v511
        %569 = vmatpush1.bf16.msra.mxu0 %v510
        %570 = vmatprep.subr.bf16.mxu0 %v515
        %571 = vmatpush1.bf16.msra.mxu0 %v514
        %572 = vmatprep.subr.bf16.mxu0 %v519
        %573 = vmatpush1.bf16.msra.mxu0 %v518
        %574 = vmatprep.subr.bf16.mxu0 %v523
        %575 = vmatpush1.bf16.msra.mxu0 %v522
        %576 = vmatprep.subr.bf16.mxu0 %v527
        %577 = vmatpush1.bf16.msra.mxu0 %v526
        %578 = vmatprep.subr.bf16.mxu0 0
        %579 = vmatpush1.bf16.msra.mxu0 0
        %580 = vmatprep.subr.bf16.mxu0 0
        %581 = vmatpush1.bf16.msra.mxu0 0
        %582 = vmatprep.subr.bf16.mxu0 0
        %583 = vmatpush1.bf16.msra.mxu0 0
        %584 = vmatprep.subr.bf16.mxu0 0
        %585 = vmatpush1.bf16.msra.mxu0 0
        %586 = vmatprep.subr.bf16.mxu0 0
        %587 = vmatpush1.bf16.msra.mxu0 0
        %588 = vmatprep.subr.bf16.mxu0 0
        %589 = vmatpush1.bf16.msra.mxu0 0
        %590 = vmatprep.subr.bf16.mxu0 0
        %591 = vmatpush1.bf16.msra.mxu0 0
        %592 = vmatprep.subr.bf16.mxu0 0
        %593 = vmatpush1.bf16.msra.mxu0 0
        %594 = vmatprep.mubr.bf16.mxu0 0
        %595 = vmatmul.mubr.bf16.gmra.mrb[0].mxu0 %v369
        %v596 = vpop.f32.mrb[0].mxu0
        %v597 = vadd.f32 0.0, %v596
        %v598 = vpop.f32.mrb[0].mxu0
        %v599 = vadd.f32 0.0, %v598
        %v600 = vpop.f32.mrb[0].mxu0
        %v601 = vpop.f32.mrb[0].mxu0
        %602 = vdwg.mxu0
        %603 = vmatprep.subr.bf16.mxu0 %v501
        %604 = vmatpush1.bf16.msra.mxu0 %v500
        %605 = vmatprep.subr.bf16.mxu0 %v505
        %606 = vmatpush1.bf16.msra.mxu0 %v504
        %607 = vmatprep.subr.bf16.mxu0 %v509
        %608 = vmatpush1.bf16.msra.mxu0 %v508
        %609 = vmatprep.subr.bf16.mxu0 %v513
        %610 = vmatpush1.bf16.msra.mxu0 %v512
        %611 = vmatprep.subr.bf16.mxu0 %v517
        %612 = vmatpush1.bf16.msra.mxu0 %v516
        %613 = vmatprep.subr.bf16.mxu0 %v521
        %614 = vmatpush1.bf16.msra.mxu0 %v520
        %615 = vmatprep.subr.bf16.mxu0 %v525
        %616 = vmatpush1.bf16.msra.mxu0 %v524
        %617 = vmatprep.subr.bf16.mxu0 %v529
        %618 = vmatpush1.bf16.msra.mxu0 %v528
        %619 = vmatprep.subr.bf16.mxu0 0
        %620 = vmatpush1.bf16.msra.mxu0 0
        %621 = vmatprep.subr.bf16.mxu0 0
        %622 = vmatpush1.bf16.msra.mxu0 0
        %623 = vmatprep.subr.bf16.mxu0 0
        %624 = vmatpush1.bf16.msra.mxu0 0
        %625 = vmatprep.subr.bf16.mxu0 0
        %626 = vmatpush1.bf16.msra.mxu0 0
        %627 = vmatprep.subr.bf16.mxu0 0
        %628 = vmatpush1.bf16.msra.mxu0 0
        %629 = vmatprep.subr.bf16.mxu0 0
        %630 = vmatpush1.bf16.msra.mxu0 0
        %631 = vmatprep.subr.bf16.mxu0 0
        %632 = vmatpush1.bf16.msra.mxu0 0
        %633 = vmatprep.subr.bf16.mxu0 0
        %634 = vmatpush1.bf16.msra.mxu0 0
        %635 = vmatprep.mubr.bf16.mxu0 0
        %636 = vmatmul.mubr.bf16.gmra.mrb[0].mxu0 %v369
        %v637 = vpop.f32.mrb[0].mxu0
        %v638 = vadd.f32 0.0, %v637
        %v639 = vpop.f32.mrb[0].mxu0
        %v640 = vadd.f32 0.0, %v639
        %v641 = vpop.f32.mrb[0].mxu0
        %v642 = vpop.f32.mrb[0].mxu0
        %643 = vdwg.mxu0
        %v644 = vld [vmem:[#allocation2] sm:$0xff]
        %646 = vset.pattern.permute.xlu0 0
        %647 = vperm.xlu0 %646, %v644
        %v648 = vpop.permute.xlu0 %647
        %v650 = vmul.f32 %v597, %v648
        %v651 = vmul.f32 %v599, %v648
        %v652 = vmul.f32 %v638, %v648
        %v653 = vmul.f32 %v640, %v648
        %v654 = vld [vmem:[%s334] sm:$0xf]
        %v656 = vlaneseq
        %v657 = vshrl.u32 %v656, 7
        %v658 = vsub.s32 0, %v657
        %v659 = vrot.slane %v654, %v658
        %v660 = vlaneseq
        %v661 = vshrl.u32 %v660, 7
        %v662 = vsub.s32 1, %v661
        %v663 = vrot.slane %v654, %v662
        %v664 = vlaneseq
        %v665 = vshrl.u32 %v664, 7
        %v666 = vsub.s32 2, %v665
        %v667 = vrot.slane %v654, %v666
        %v668 = vlaneseq
        %v669 = vshrl.u32 %v668, 7
        %v670 = vsub.s32 3, %v669
        %v671 = vrot.slane %v654, %v670
        %v676 = vmul.f32 %v650, %v659
        %v677 = vmul.f32 %v651, %v663
        %v678 = vmul.f32 %v652, %v667
        %v679 = vmul.f32 %v653, %v671
        %v680 = vmax.f32 %v676, -0.99999
        %v681 = vmax.f32 %v677, -0.99999
        %v682 = vmax.f32 %v678, -0.99999
        %v683 = vmax.f32 %v679, -0.99999
        %v684 = vmin.f32 %v680, 0.99999
        %v685 = vmin.f32 %v681, 0.99999
        %v686 = vmin.f32 %v682, 0.99999
        %v687 = vmin.f32 %v683, 0.99999
        %s688 = smul.u32 %s20, 512
        %v689 = vlaneseq
        %v690 = vand.u32 %v689, 127
        %v691 = vadd.s32 %v690, 128
        %v692 = vadd.s32 %v690, 256
        %v693 = vadd.s32 %v690, 384
        %v694 = vstv %s688
        %v695 = vadd.s32 %v694, %v690
        %v696 = vadd.s32 %v694, %v691
        %v697 = vadd.s32 %v694, %v692
        %v698 = vadd.s32 %v694, %v693
        %v699 = vld [vmem:[%s339] sm:$0xff]
        %700 = vset.pattern.permute.xlu0 0
        %701 = vperm.xlu0 %700, %v699
        %v702 = vpop.permute.xlu0 %701
        %vm703 = vcmp.eq.s32.totalorder %v695, %v702
        %vm704 = vcmp.eq.s32.totalorder %v696, %v702
        %vm705 = vcmp.eq.s32.totalorder %v697, %v702
        %vm706 = vcmp.eq.s32.totalorder %v698, %v702
        %vm707 = vcmp.lt.s32.totalorder %v695, 640
        %vm708 = vcmp.lt.s32.totalorder %v696, 640
        %vm709 = vcmp.lt.s32.totalorder %v697, 640
        %vm710 = vcmp.lt.s32.totalorder %v698, 640
        %v711 = vsel %vm703, %v684, 0.0
        %v712 = vsel %vm704, %v685, 0.0
        %v713 = vsel %vm705, %v686, 0.0
        %v714 = vsel %vm706, %v687, 0.0
        %v715 = vadd.f32 %v711, %v712
        %v716 = vadd.f32 %v715, %v713
        %v717 = vadd.f32 %v716, %v714
        %718 = vadd.xlane.f32.xlu0 %v717
        %v719 = vpop.xlane.xlu0 %718
        %v720 = vmul.f32 %v719, %v719
        %v721 = vsub.f32 1.0, %v720
        %v722 = vmax.f32 %v721, 0.0
        %v723 = vrsqrt.pop %v722
        %v724 = vmul.f32 %v722, %v723
        %vm725 = vcmp.eq.f32.partialorder %v722, inf
        %v726 = vsel %vm725, %v722, %v724
        %vm727 = vcmp.eq.f32.partialorder %v722, 0.0
        %v728 = vand.u32 %v722, 2147483648
        %v729 = vsel %vm727, %v728, %v726
        %v730 = vmul.f32 %v719, 0.87758255
        %v731 = vmul.f32 %v729, 0.47942555
        %v732 = vsub.f32 %v730, %v731
        %vm733 = vcmp.lt.f32.partialorder %v719, -0.8775813
        %v734 = vsel %vm733, -1.0, %v732
        %v735 = vmul.f32 %v734, 64.0
        %v736 = vmul.f32 %v684, 64.0
        %v737 = vmul.f32 %v685, 64.0
        %v738 = vmul.f32 %v686, 64.0
        %v739 = vmul.f32 %v687, 64.0
        %v740 = vsel %vm703, %v735, %v736
        %v741 = vsel %vm704, %v735, %v737
        %v742 = vsel %vm705, %v735, %v738
        %v743 = vsel %vm706, %v735, %v739
        %v744 = vsel %vm707, %v740, -1e+30
        %v745 = vsel %vm708, %v741, -1e+30
        %v746 = vsel %vm709, %v742, -1e+30
        %v747 = vsel %vm710, %v743, -1e+30
        %v748 = vld [vmem:[#allocation3] sm:$0xff]
        %v749 = vmax.f32 %v744, %v745
        %v750 = vmax.f32 %v746, %v747
        %v751 = vmax.f32 %v749, %v750
        %752 = vmax.xlane.f32.xlu0 %v751
        %v753 = vpop.xlane.xlu0 %752
        %v754 = vmax.f32 %v748, %v753
        %v755 = vsub.f32 %v748, %v754
        %v756 = vmul.f32 %v755, 1.442695
        %v757 = vpow.pop %v756
        %v758 = vld [vmem:[#allocation4] sm:$0xff]
        %v759 = vmul.f32 %v757, %v758
        %761 = vset.pattern.permute.xlu0 0
        %762 = vperm.xlu0 %761, %v754
        %v763 = vpop.permute.xlu0 %762
        %v765 = vsub.f32 %v744, %v763
        %v766 = vsub.f32 %v745, %v763
        %v767 = vsub.f32 %v746, %v763
        %v768 = vsub.f32 %v747, %v763
        %v769 = vmul.f32 %v765, 1.442695
        %v770 = vpow.pop %v769
        %v771 = vmul.f32 %v766, 1.442695
        %v772 = vpow.pop %v771
        %v773 = vmul.f32 %v767, 1.442695
        %v774 = vpow.pop %v773
        %v775 = vmul.f32 %v768, 1.442695
        %v776 = vpow.pop %v775
        %v777 = vadd.f32 %v770, %v772
        %v778 = vadd.f32 %v777, %v774
        %v779 = vadd.f32 %v778, %v776
        %780 = vadd.xlane.f32.xlu0 %v779
        %v781 = vpop.xlane.xlu0 %780
        %v782 = vadd.f32 %v759, %v781
        %vm783 = vcmask 7168
        %784 = vst.msk [vmem:[#allocation4] sm:$0xff] %vm783, %v782
        %785 = vst.msk [vmem:[#allocation3] sm:$0xff] %vm783, %v754
        %v786 = vld [vmem:[#allocation5] sm:$0xff]
        %v787 = vsel %vm703, %v744, 0.0
        %v788 = vsel %vm704, %v745, 0.0
        %v789 = vsel %vm705, %v746, 0.0
        %v790 = vsel %vm706, %v747, 0.0
        %v791 = vadd.f32 %v787, %v788
        %v792 = vadd.f32 %v791, %v789
        %v793 = vadd.f32 %v792, %v790
        %794 = vadd.xlane.f32.xlu0 %v793
        %v795 = vpop.xlane.xlu0 %794
        %v796 = vadd.f32 %v786, %v795
        %797 = vst.msk [vmem:[#allocation5] sm:$0xff] %vm783, %v796
        %p798 = scmp.eq.s32.totalorder %s20, 1
        // Predicated region
        $region64: #{arcface_loss.1} parent=54 // pred_check
          %p799 = pneg %p798
        $region65: #{arcface_loss.1} parent=54 // pred_check_branch
          %801 = sbr.rel (%p799) target = $region67
        $region66: #{arcface_loss.1} parent=54 // pred_region
          %v802 = vld [vmem:[#allocation3] sm:$0xff]
          %v803 = vld [vmem:[#allocation4] sm:$0xff]
          %v804 = vlog2.pop %v803
          %v805 = vmul.f32 %v804, 0.6931472
          %v806 = vadd.f32 %v802, %v805
          %v807 = vld [vmem:[#allocation5] sm:$0xff]
          %v808 = vsub.f32 %v806, %v807
          %809 = vst.msk [vmem:[%s343] sm:$0xff] %vm783, %v808
        $region67: #{arcface_loss.1} parent=54 // pred_fallthru
          _
        %p810 = scmp.lt.s32.totalorder %s19, 0
        %s811 = scalar_select %p810, %s19, 0
        %s812 = smul.addr %s811, 8
        %s813 = scalar_lea.vmem %s4, %s812
        // Predicated region
        $region68: #{arcface_loss.1} parent=54 // pred_check
          %p814 = pneg %p149
        $region69: #{arcface_loss.1} parent=54 // pred_check_branch
          %816 = sbr.rel (%p814) target = $region71
        $region70: #{arcface_loss.1} parent=54 // pred_region
          _
        $region71: #{arcface_loss.1} parent=54 // pred_fallthru
          _
        // Predicated region
        $region72: #{arcface_loss.1} parent=54 // pred_check
          %p817 = pneg %p149
        $region73: #{arcface_loss.1} parent=54 // pred_check_branch
          %819 = sbr.rel (%p817) target = $region75
        $region74: #{arcface_loss.1} parent=54 // pred_region
          %p820 = scmp.lt.s32.totalorder %s19, 0
          %s821 = scalar_select %p820, %s19, 0
          %s822 = smul.addr %s821, 8
          %s823 = scalar_lea.vmem %s4, %s822
        $region75: #{arcface_loss.1} parent=54 // pred_fallthru
          _
      $region55: #{arcface_loss.1} parent=5 // pred_fallthru
        _
      %p824 = scmp.le.s32.totalorder 2, %s10
      // Predicated region
      $region76: #{arcface_loss.1} parent=5 // pred_check
        %p825 = pneg %p824
      $region77: #{arcface_loss.1} parent=5 // pred_check_branch
        %827 = sbr.rel (%p825) target = $region79
      $region78: #{arcface_loss.1} parent=5 // pred_region
        %s828 = ssub.s32 %s10, 2
      $region79: #{arcface_loss.1} parent=5 // pred_fallthru
        _
    $region6: #{arcface_loss.1} parent=1 // loop_footer
      %s14 = sadd.s32 1, %s10
    $region7: #{arcface_loss.1} parent=1 // loop_footer_branch
      %9 = sbr.rel target = $region3
    $region8: #{arcface_loss.1} parent=1 // loop_exit
      _

</llo_original>
